<compile_context>
chip_gen: v5e
topology: v5e:2x2
jax: 0.10.0
libtpu: 0.0.40
codegen_flags: <defaults>
</compile_context>

<pallas_src>
import math

import jax
import jax.numpy as jnp
from jax.experimental import pallas as pl
from jax.experimental.pallas import tpu as pltpu


def _posenc_kernel(x_ref, pe_ref, o_ref):
    # x_ref : (tile_seq, B, E)
    # pe_ref: (tile_seq, 1, E)  -> broadcast-add over the batch axis (VPU)
    o_ref[...] = x_ref[...] + pe_ref[...]


def make_pos_embedding(emb_size: int, maxlen: int = 5000, dtype=jnp.float32):
    """Deterministic buffer construction, identical to the PyTorch __init__.

    Keep `dtype` matched to the activation dtype (e.g. bf16 activations ->
    bf16 pos_embedding) so the pe-side DMA traffic is not double-width.
    """
    den = jnp.exp(
        -jnp.arange(0, emb_size, 2, dtype=jnp.float32) * math.log(10000.0) / emb_size
    )
    pos = jnp.arange(0, maxlen, dtype=jnp.float32).reshape(maxlen, 1)
    pe = jnp.zeros((maxlen, emb_size), dtype=jnp.float32)
    pe = pe.at[:, 0::2].set(jnp.sin(pos * den))
    pe = pe.at[:, 1::2].set(jnp.cos(pos * den))
    return pe.reshape(maxlen, 1, emb_size).astype(dtype)  # (maxlen, 1, emb_size)


# ~2 MiB x-tile: with double-buffered x-in, pe-in and out blocks the total VMEM
# footprint stays far below the v7x scoped limit while being large enough to
# reach ~85% of HBM roofline (per-step overhead ~0.35 us).
_VMEM_TILE_BUDGET_BYTES = 2 * 1024 * 1024


def _choose_tile_seq(S: int, B: int, E: int, itemsize: int) -> int:
    bytes_per_seq_row = B * E * itemsize
    tile = max(1, _VMEM_TILE_BUDGET_BYTES // bytes_per_seq_row)
    # Keep at least 2 blocks when S permits so the two v7x TensorCores both get
    # work on the parallel seq axis (and the pipeline actually overlaps).
    tile = min(tile, max(1, pl.cdiv(S, 2)))
    return min(tile, S)


def positional_encoding(token_embedding, pos_embedding, *, tile_seq=None):
    """Equivalent of PositionalEncoding.forward in eval mode (dropout = identity).

    token_embedding: (S, B, E)
    pos_embedding  : (maxlen, 1, E), maxlen >= S, same dtype as token_embedding
    """
    # TODO(synk): nn.Dropout is identity in eval mode; training-mode dropout uses
    # torch's RNG stream and cannot be reproduced bit-exactly, so it is omitted.
    S, B, E = token_embedding.shape
    maxlen = pos_embedding.shape[0]
    assert S <= maxlen, f"seq_len {S} exceeds pos_embedding maxlen {maxlen}"
    assert pos_embedding.shape == (maxlen, 1, E)
    assert pos_embedding.dtype == token_embedding.dtype

    if tile_seq is None:
        tile_seq = _choose_tile_seq(S, B, E, token_embedding.dtype.itemsize)
    tile_seq = max(1, min(tile_seq, S))
    grid = (pl.cdiv(S, tile_seq),)  # ragged last block is masked by Pallas

    return pl.pallas_call(
        _posenc_kernel,
        out_shape=jax.ShapeDtypeStruct((S, B, E), token_embedding.dtype),
        grid=grid,
        in_specs=[
            # Last two block dims equal the full array dims -> (8,128) rule ok.
            pl.BlockSpec((tile_seq, B, E), lambda i: (i, 0, 0)),
            # Full (maxlen, 1, E) buffer: index_map only reads the first
            # ceil(S/tile_seq) blocks, so no host-side `pe[:S]` slice is needed.
            pl.BlockSpec((tile_seq, 1, E), lambda i: (i, 0, 0)),
        ],
        out_specs=pl.BlockSpec((tile_seq, B, E), lambda i: (i, 0, 0)),
        # Pure read-modify-write: reuse token_embedding's HBM buffer for the
        # output instead of allocating a second S*B*E array.
        input_output_aliases={0: 0},
        compiler_params=pltpu.CompilerParams(
            dimension_semantics=("parallel",),
        ),
    )(token_embedding, pos_embedding)


if __name__ == "__main__":
    emb_size = 32
    maxlen = 64
    seq_len = 8
    batch = 2
    dropout_p = 0.1  # unused in eval mode (identity)

    key = jax.random.PRNGKey(0)
    token_embedding = jax.random.normal(
        key, (seq_len, batch, emb_size), dtype=jnp.float32
    )
    pos_embedding = make_pos_embedding(emb_size, maxlen, dtype=jnp.float32)

    # Pure-JAX reference computed BEFORE the kernel call (output aliases the
    # token_embedding buffer, so don't rely on it afterwards).
    ref = token_embedding + pos_embedding[:seq_len]

    out = positional_encoding(token_embedding, pos_embedding)
    out = jax.block_until_ready(out)

    assert out.shape == (seq_len, batch, emb_size)
    assert jnp.allclose(out, ref, atol=1e-6), "mismatch vs reference"

    print("KERNEL_OK")
</pallas_src>

<mosaic_0001>
module attributes {stable_mosaic.version = 11 : i64} {
  func.func @_posenc_kernel(%arg0: i32, %arg1: memref<4x2x32xf32, #tpu.memory_space<vmem>>, %arg2: memref<4x1x32xf32, #tpu.memory_space<vmem>>, %arg3: memref<4x2x32xf32, #tpu.memory_space<vmem>>) attributes {dimension_semantics = [#tpu.dimension_semantics<parallel>], iteration_bounds = array<i64: 2>, scalar_prefetch = 0 : i64, scratch_operands = 0 : i64, tpu.core_type = #tpu.core_type<tc>, window_params = [{transform_indices = @transform_0, window_bounds = array<i64: 4, 2, 32>}, {transform_indices = @transform_1, window_bounds = array<i64: 4, 1, 32>}, {transform_indices = @transform_2, window_bounds = array<i64: 4, 2, 32>}]} {
    %c0 = arith.constant 0 : index
    %c0_0 = arith.constant 0 : index
    %c0_1 = arith.constant 0 : index
    %0 = vector.load %arg1[%c0, %c0_0, %c0_1] : memref<4x2x32xf32, #tpu.memory_space<vmem>>, vector<4x2x32xf32>
    %c0_2 = arith.constant 0 : index
    %c0_3 = arith.constant 0 : index
    %c0_4 = arith.constant 0 : index
    %1 = vector.load %arg2[%c0_2, %c0_3, %c0_4] : memref<4x1x32xf32, #tpu.memory_space<vmem>>, vector<4x1x32xf32>
    %2 = vector.broadcast %1 : vector<4x1x32xf32> to vector<4x2x32xf32>
    %3 = arith.addf %0, %2 : vector<4x2x32xf32>
    %c0_5 = arith.constant 0 : index
    %c0_6 = arith.constant 0 : index
    %c0_7 = arith.constant 0 : index
    %4 = vector.load %arg3[%c0_5, %c0_6, %c0_7] : memref<4x2x32xf32, #tpu.memory_space<vmem>>, vector<4x2x32xf32>
    tpu.vector_store %arg3[%c0_5, %c0_6, %c0_7], %3 {strides = array<i32>} : memref<4x2x32xf32, #tpu.memory_space<vmem>>, vector<4x2x32xf32>,
    return
  }
  func.func @transform_0(%arg0: i32) -> (i32, i32, i32) {
    %c0_i32 = arith.constant 0 : i32
    %c0_i32_0 = arith.constant 0 : i32
    %c0_i32_1 = arith.constant 0 : i32
    return %arg0, %c0_i32, %c0_i32_0 : i32, i32, i32
  }
  func.func @transform_1(%arg0: i32) -> (i32, i32, i32) {
    %c0_i32 = arith.constant 0 : i32
    %c0_i32_0 = arith.constant 0 : i32
    %c0_i32_1 = arith.constant 0 : i32
    return %arg0, %c0_i32, %c0_i32_0 : i32, i32, i32
  }
  func.func @transform_2(%arg0: i32) -> (i32, i32, i32) {
    %c0_i32 = arith.constant 0 : i32
    %c0_i32_0 = arith.constant 0 : i32
    %c0_i32_1 = arith.constant 0 : i32
    return %arg0, %c0_i32, %c0_i32_0 : i32, i32, i32
  }
}

</mosaic_0001>

<llo_original>
// kernel: tpu_custom_call.1
$region0: #{tpu_custom_call.1}
  #allocation0 [shape = 'u32[]', space=smem, size = 0x4, offset = 0x4, fixed_abs, tag = 'smem constant byte address 0x4 - core index']
  #allocation1 [shape = 'u32[72,128]{1,0:T(1,128)}', space=vmem, size = 0x9000, scoped, tag = 'internal scratch']
  %s0 = inlined_call_operand.hbm [shape: f32[8,2,32], index: 0, kind: input, shape index: {}, may-alias: {0,2}]
  %s1 = inlined_call_operand.vmem [shape: f32[64,1,32], index: 1, kind: input, shape index: {}]
  %s2 = inlined_call_operand.hbm [shape: f32[8,2,32], index: 2, kind: output, shape index: {}, may-alias: {0,2}]
  %s3 = sld [smem:[#allocation0]]
  $region45: #{tpu_custom_call.1} parent=0
    _
  %s5 = ssub.s32 1, %s3
  %s6 = scalar_select 0, %s5, %s3
  $region1: #{tpu_custom_call.1} parent=0
    #allocation2 [shape = 'u8[8192]{0}', space=vmem, size = 0x2000, scoped, tag = 'input window, operand 0']
    #allocation3 [shape = 's32[2]{0}', space=sflag, size = 0x8, scoped, tag = 'scoped memory for tpu_custom_call.1']
    #allocation4 [shape = 's32[2]{0}', space=sflag, size = 0x8, scoped, tag = 'scoped memory for tpu_custom_call.1']
    #allocation5 [shape = 'u8[8192]{0}', space=vmem, size = 0x2000, scoped, tag = 'output window, operand 0']
    %7 = vsyncpa [#allocation3], 0
    %s8 = scalar_lea.sflag [#allocation3], 1
    %9 = vsyncpa %s8, 0
    %10 = vsyncpa [#allocation4], 0
    %s11 = scalar_lea.sflag [#allocation4], 1
    %12 = vsyncpa %s11, 0
    loop: start=0, step=1, limit=4
    $region2: #{tpu_custom_call.1} parent=1 // loop_pre_header
      _
    $region3: #{tpu_custom_call.1} parent=1 // loop_header
      %s14 = sphi 0, %s18
      %p15 = scmp.ge.s32.totalorder %s14, 4
      %s24 = sphi 0, %s26
      %s27 = sphi 0, %s24
      %s28 = sphi 0, %s27
      %s44 = sphi 0, %s28
      %s50 = sphi 0, %s52
      %s53 = sphi 0, %s50
      %s54 = sphi 0, %s53
      %s70 = sphi 0, %s54
      %s76 = sphi 0, %s78
      %s79 = sphi 0, %s76
      %s80 = sphi 0, %s79
      %s96 = sphi 0, %s80
    $region4: #{tpu_custom_call.1} parent=1 // loop_header_branch
      %17 = sbr.rel (%p15) target = $region8
    $region5: #{tpu_custom_call.1} parent=1 // loop_body
      %s19 = ssub.s32 %s14, 1
      %s20 = ssub.s32 %s14, 2
      %s21 = sadd.s32 %s14, 1
      %s22 = ssub.s32 %s14, %s21
      %p23 = scmp.eq.s32.totalorder %s22, 0
      %s25 = sadd.s32 %s24, 1
      %s26 = scalar_select %p23, %s24, %s25
      %p29 = pneg %p23
      %p30 = scmp.eq.s32.totalorder %s14, 1
      %p31 = por %p29, %p30
      %p32 = scmp.ne.s32.totalorder %s24, %s27
      %p33 = scmp.eq.s32.totalorder %s14, 0
      %p34 = por %p32, %p33
      %p35 = scmp.ne.s32.totalorder %s24, %s27
      %p36 = scmp.eq.s32.totalorder %s19, 1
      %p37 = por %p35, %p36
      %p38 = scmp.ne.s32.totalorder %s27, %s28
      %p39 = scmp.eq.s32.totalorder %s19, 0
      %p40 = por %p38, %p39
      %p41 = scmp.ne.s32.totalorder %s27, %s28
      %p42 = scmp.eq.s32.totalorder %s20, 1
      %p43 = por %p41, %p42
      %p45 = scmp.ne.s32.totalorder %s28, %s44
      %p46 = scmp.eq.s32.totalorder %s20, 0
      %p47 = por %p45, %p46
      %s48 = ssub.s32 %s14, %s21
      %p49 = scmp.eq.s32.totalorder %s48, 0
      %s51 = sadd.s32 %s50, 1
      %s52 = scalar_select %p49, %s50, %s51
      %p55 = pneg %p49
      %p56 = scmp.eq.s32.totalorder %s14, 1
      %p57 = por %p55, %p56
      %p58 = scmp.ne.s32.totalorder %s50, %s53
      %p59 = scmp.eq.s32.totalorder %s14, 0
      %p60 = por %p58, %p59
      %p61 = scmp.ne.s32.totalorder %s50, %s53
      %p62 = scmp.eq.s32.totalorder %s19, 1
      %p63 = por %p61, %p62
      %p64 = scmp.ne.s32.totalorder %s53, %s54
      %p65 = scmp.eq.s32.totalorder %s19, 0
      %p66 = por %p64, %p65
      %p67 = scmp.ne.s32.totalorder %s53, %s54
      %p68 = scmp.eq.s32.totalorder %s20, 1
      %p69 = por %p67, %p68
      %p71 = scmp.ne.s32.totalorder %s54, %s70
      %p72 = scmp.eq.s32.totalorder %s20, 0
      %p73 = por %p71, %p72
      %s74 = ssub.s32 %s14, %s21
      %p75 = scmp.eq.s32.totalorder %s74, 0
      %s77 = sadd.s32 %s76, 1
      %s78 = scalar_select %p75, %s76, %s77
      %p81 = pneg %p75
      %p82 = scmp.eq.s32.totalorder %s14, 1
      %p83 = por %p81, %p82
      %p84 = scmp.ne.s32.totalorder %s76, %s79
      %p85 = scmp.eq.s32.totalorder %s14, 0
      %p86 = por %p84, %p85
      %p87 = scmp.ne.s32.totalorder %s76, %s79
      %p88 = scmp.eq.s32.totalorder %s19, 1
      %p89 = por %p87, %p88
      %p90 = scmp.ne.s32.totalorder %s79, %s80
      %p91 = scmp.eq.s32.totalorder %s19, 0
      %p92 = por %p90, %p91
      %p93 = scmp.ne.s32.totalorder %s79, %s80
      %p94 = scmp.eq.s32.totalorder %s20, 1
      %p95 = por %p93, %p94
      %p97 = scmp.ne.s32.totalorder %s80, %s96
      %p98 = scmp.eq.s32.totalorder %s20, 0
      %p99 = por %p97, %p98
      %p100 = scmp.le.s32.totalorder 1, %s14
      %p101 = scmp.lt.s32.totalorder %s14, 3
      %p102 = pnand %p100, %p101
      %p103 = pneg %p102
      // Predicated region
      $region9: #{tpu_custom_call.1} parent=5 // pred_check
        _
      $region10: #{tpu_custom_call.1} parent=5 // pred_check_branch
        %105 = sbr.rel (%p102) target = $region12
      $region11: #{tpu_custom_call.1} parent=5 // pred_region
        %s106 = ssub.s32 %s14, 1
      $region12: #{tpu_custom_call.1} parent=5 // pred_fallthru
        _
      %p107 = scmp.lt.s32.totalorder %s14, 2
      // Predicated region
      $region13: #{tpu_custom_call.1} parent=5 // pred_check
        %p108 = pneg %p107
      $region14: #{tpu_custom_call.1} parent=5 // pred_check_branch
        %110 = sbr.rel (%p108) target = $region16
      $region15: #{tpu_custom_call.1} parent=5 // pred_region
        // Predicated region
        $region17: #{tpu_custom_call.1} parent=15 // pred_check
          %p111 = pneg %p34
        $region18: #{tpu_custom_call.1} parent=15 // pred_check_branch
          %113 = sbr.rel (%p111) target = $region20
        $region19: #{tpu_custom_call.1} parent=15 // pred_region
          %s114 = sand.u32 %s24, 1
          %s115 = scalar_lea.sflag [#allocation3], %s114
          %s116 = sand.u32 %s24, 1
          %s117 = smul.addr %s116, 8
          %s118 = scalar_lea.vmem [#allocation2], %s117
          %s119 = smul.u32 4, %s14
          %121 = vsyncadd %s115, 0
          %s122 = smul.addr %s119, 2
          %s123 = scalar_lea.hbm %s0, %s122
          %s124 = sshll.u32 %s123, 4
          %s125 = int_to_ptr.hbm [resolvable:$true] %s124
          %s126 = sshll.u32 %s118, 4
          %s127 = int_to_ptr.vmem [resolvable:$true] %s126
          %132 = dma.hbm_to_vmem [thread:$0]  %s125, 128, %s127, %s115, 32, 32, 2
        $region20: #{tpu_custom_call.1} parent=15 // pred_fallthru
          _
        // Predicated region
        $region21: #{tpu_custom_call.1} parent=15 // pred_check
          %p133 = pneg %p60
        $region22: #{tpu_custom_call.1} parent=15 // pred_check_branch
          %135 = sbr.rel (%p133) target = $region24
        $region23: #{tpu_custom_call.1} parent=15 // pred_region
          %s136 = smul.u32 4, %s14
          %p137 = scmp.lt.s32.totalorder %s136, 63
          %s138 = scalar_select %p137, %s136, 63
          %s139 = scalar_lea.vmem %s1, %s138
          %s140 = smul.u32 4, %s14
        $region24: #{tpu_custom_call.1} parent=15 // pred_fallthru
          _
      $region16: #{tpu_custom_call.1} parent=5 // pred_fallthru
        _
      %p141 = scmp.le.s32.totalorder 1, %s14
      %p142 = scmp.lt.s32.totalorder %s14, 3
      %p143 = pnand %p141, %p142
      %p144 = pneg %p143
      // Predicated region
      $region25: #{tpu_custom_call.1} parent=5 // pred_check
        _
      $region26: #{tpu_custom_call.1} parent=5 // pred_check_branch
        %146 = sbr.rel (%p143) target = $region28
      $region27: #{tpu_custom_call.1} parent=5 // pred_region
        %s147 = ssub.s32 %s14, 1
        %s148 = sand.u32 %s27, 1
        %s149 = scalar_lea.sflag [#allocation3], %s148
        %s150 = sand.u32 %s27, 1
        %s151 = smul.addr %s150, 8
        %s152 = scalar_lea.vmem [#allocation2], %s151
        // Predicated region
        $region29: #{tpu_custom_call.1} parent=27 // pred_check
          %p153 = pneg %p40
        $region30: #{tpu_custom_call.1} parent=27 // pred_check_branch
          %155 = sbr.rel (%p153) target = $region32
        $region31: #{tpu_custom_call.1} parent=27 // pred_region
          %157 = dma.done %s149, 128
        $region32: #{tpu_custom_call.1} parent=27 // pred_fallthru
          _
        %s158 = sand.u32 %s27, 1
        %s159 = scalar_lea.sflag [#allocation3], %s158
        %s160 = sand.u32 %s27, 1
        %s161 = smul.addr %s160, 8
        %s162 = scalar_lea.vmem [#allocation2], %s161
        %p163 = pneg %p40
        %p164 = pneg %p37
        %s165 = smul.u32 4, %s19
        %p166 = scmp.lt.s32.totalorder %s165, 63
        %s167 = scalar_select %p166, %s165, 63
        %s168 = scalar_lea.vmem %s1, %s167
        %p169 = pneg %p66
        %p170 = pneg %p63
        %p171 = pneg %p92
        %p172 = pneg %p89
        %s173 = sand.u32 %s79, 1
        %s174 = scalar_lea.sflag [#allocation4], %s173
        %s175 = sand.u32 %s79, 1
        %s176 = smul.addr %s175, 8
        %s177 = scalar_lea.vmem [#allocation5], %s176
        %s178 = smul.u32 4, %s19
        %s179 = smul.u32 4, %s19
        %p180 = scmp.lt.s32.totalorder %s179, 63
        %s181 = scalar_select %p180, %s179, 63
        %s182 = scalar_lea.vmem %s1, %s181
        %s183 = smul.u32 4, %s19
        %s184 = smul.u32 4, %s19
        %v185 = vld [vmem:[%s152] sm:$0x3]
        %v186 = vld [vmem:[%s152 + $0x2] sm:$0x3]
        %v187 = vld [vmem:[%s152 + $0x4] sm:$0x3]
        %v188 = vld [vmem:[%s152 + $0x6] sm:$0x3]
        %v189 = vld [vmem:[%s182] sm:$0x1]
        %v190 = vld [vmem:[%s182 + $0x1] sm:$0x1]
        %v191 = vld [vmem:[%s182 + $0x2] sm:$0x1]
        %v192 = vld [vmem:[%s182 + $0x3] sm:$0x1]
        %v197 = vperm.slane %v189, 0
        %v198 = vperm.slane %v190, 0
        %v199 = vperm.slane %v191, 0
        %v200 = vperm.slane %v192, 0
        %v205 = vadd.f32 %v185, %v197
        %v206 = vadd.f32 %v186, %v198
        %v207 = vadd.f32 %v187, %v199
        %v208 = vadd.f32 %v188, %v200
        %vm209 = vcmask 254976
        %210 = vst.msk [vmem:[%s177] sm:$0x3] %vm209, %v205
        %211 = vst.msk [vmem:[%s177 + $0x2] sm:$0x3] %vm209, %v206
        %212 = vst.msk [vmem:[%s177 + $0x4] sm:$0x3] %vm209, %v207
        %213 = vst.msk [vmem:[%s177 + $0x6] sm:$0x3] %vm209, %v208
        %s214 = sand.u32 %s79, 1
        %s215 = scalar_lea.sflag [#allocation4], %s214
        %s216 = sand.u32 %s79, 1
        %s217 = smul.addr %s216, 8
        %s218 = scalar_lea.vmem [#allocation5], %s217
        // Predicated region
        $region33: #{tpu_custom_call.1} parent=27 // pred_check
          %p219 = pneg %p89
        $region34: #{tpu_custom_call.1} parent=27 // pred_check_branch
          %221 = sbr.rel (%p219) target = $region36
        $region35: #{tpu_custom_call.1} parent=27 // pred_region
          %s222 = smul.u32 4, %s19
          %224 = vsyncadd %s215, 0
          %s225 = smul.addr %s222, 2
          %s226 = scalar_lea.hbm %s2, %s225
          %s227 = sshll.u32 %s218, 4
          %s228 = int_to_ptr.vmem [resolvable:$true] %s227
          %s229 = sshll.u32 %s226, 4
          %s230 = int_to_ptr.hbm [resolvable:$true] %s229
          %235 = dma.vmem_to_hbm [thread:$0]  %s228, 128, %s230, %s215, 32, 32, 2
        $region36: #{tpu_custom_call.1} parent=27 // pred_fallthru
          _
      $region28: #{tpu_custom_call.1} parent=5 // pred_fallthru
        _
      %p236 = scmp.le.s32.totalorder 2, %s14
      // Predicated region
      $region37: #{tpu_custom_call.1} parent=5 // pred_check
        %p237 = pneg %p236
      $region38: #{tpu_custom_call.1} parent=5 // pred_check_branch
        %239 = sbr.rel (%p237) target = $region40
      $region39: #{tpu_custom_call.1} parent=5 // pred_region
        %s240 = ssub.s32 %s14, 2
        // Predicated region
        $region41: #{tpu_custom_call.1} parent=39 // pred_check
          %p241 = pneg %p95
        $region42: #{tpu_custom_call.1} parent=39 // pred_check_branch
          %243 = sbr.rel (%p241) target = $region44
        $region43: #{tpu_custom_call.1} parent=39 // pred_region
          %s244 = sand.u32 %s80, 1
          %s245 = scalar_lea.sflag [#allocation4], %s244
          %s246 = sand.u32 %s80, 1
          %s247 = smul.addr %s246, 8
          %s248 = scalar_lea.vmem [#allocation5], %s247
          %250 = dma.done %s245, 128
        $region44: #{tpu_custom_call.1} parent=39 // pred_fallthru
          _
      $region40: #{tpu_custom_call.1} parent=5 // pred_fallthru
        _
    $region6: #{tpu_custom_call.1} parent=1 // loop_footer
      %s18 = sadd.s32 1, %s14
    $region7: #{tpu_custom_call.1} parent=1 // loop_footer_branch
      %13 = sbr.rel target = $region3
    $region8: #{tpu_custom_call.1} parent=1 // loop_exit
      _
    %251 = vsyncpa [#allocation3], 1
    %s252 = scalar_lea.sflag [#allocation3], 1
    %253 = vsyncpa %s252, 1
    %254 = vsyncpa [#allocation4], 1
    %s255 = scalar_lea.sflag [#allocation4], 1
    %256 = vsyncpa %s255, 1

</llo_original>
